<compile_context>
chip_gen: v7x
topology: tpu7x:2x2x1
jax: 0.10.0
libtpu: 0.0.40
codegen_flags: <defaults>
</compile_context>

<pallas_src>
import functools
import numpy as np
import jax
import jax.numpy as jnp
from jax.experimental import pallas as pl
from jax.experimental.pallas import tpu as pltpu

# ---------------- small, module-consistent config ----------------
H   = 64            # hidden_size
NH  = 4             # num_attention_heads
D   = H // NH       # head_dim = 16
DH  = D // 2        # head_dim_half
KVH = 2             # num_key_value_heads
G   = NH // KVH     # num_key_value_groups = 2
IM  = 128           # intermediate_size
Q   = 8             # current sequence length
P   = 8             # past kv length
KV  = P + Q         # kv_seq_len
EPS = 1e-6          # rms_norm_eps
PROMPT_HEAD_LENGTH = 2
SPLIT_FACTOR       = 6

QW = NH * D                     # 64   query column width
KW = KVH * D                    # 32   key / value column width
EXT_OUT = 2 * QW + 3 * KW       # 224  wqkv_ext output features: [Q | Qrot | K | Krot | V]
PACK_OUT = H + 2 * KW           # 128  packed kernel output width


def decoder_layer_kernel(x_ref,                    # (Q, H)            f32
                         mask_ref,                 # (NH*Q, KVH*KV)    f32  block attention mask
                         cosq_ref, sinq_ref,       # (Q, D)            f32
                         cosk_ref, sink_ref,       # (Q, D)            f32
                         pk_ref, pv_ref,           # (KVH, P, D)       f32
                         keep_ref,                 # (Q, 2*IM)         f32  text/vision 0/1 mask
                         wqkv_ref,                 # (H, EXT_OUT)      bf16 [Q|Qrot|K|Krot|V]
                         wo_ref,                   # (H, H)            bf16
                         anw_ref, fnw_ref,         # (1, H)            f32
                         w13_ref,                  # (H, 4*IM)         bf16 [w1|w1v|w3|w3v]
                         w2c_ref,                  # (2*IM, H)         bf16 [w2;w2v]
                         out_ref):                 # (Q, PACK_OUT)     f32  [out|newK|newV]
    x = x_ref[...]

    # ---- attention_norm : weight * (x / (sqrt(mean(x^2)) + eps))   (eps OUTSIDE sqrt, as in ref)
    rms = jnp.sqrt(jnp.mean(x * x, axis=-1, keepdims=True))
    xn = anw_ref[...] * (x * pl.reciprocal(rms + EPS, approx=True))

    # ---- one fused extended projection: [Q | rot_half(Q) | K | rot_half(K) | V] columns
    qkv = jnp.dot(xn.astype(jnp.bfloat16), wqkv_ref[...],
                  preferred_element_type=jnp.float32)            # (Q, EXT_OUT)

    q_raw  = qkv[:, :QW]                                         # (Q, NH*D)   (1/sqrt(D) folded)
    q_roth = qkv[:, QW:2 * QW]                                   # (Q, NH*D)
    k_raw  = qkv[:, 2 * QW:2 * QW + KW]                          # (Q, KVH*D)
    k_roth = qkv[:, 2 * QW + KW:2 * QW + 2 * KW]                 # (Q, KVH*D)
    v_new  = qkv[:, 2 * QW + 2 * KW:]                            # (Q, KVH*D)

    # ---- RoPE is now pure elementwise (rotate_half baked into the weight columns).
    #      cos/sin tables are compact (Q, D); lane-tile them in-register.
    cos_q = jnp.concatenate([cosq_ref[...]] * NH, axis=-1)       # (Q, NH*D)
    sin_q = jnp.concatenate([sinq_ref[...]] * NH, axis=-1)
    cos_k = jnp.concatenate([cosk_ref[...]] * KVH, axis=-1)      # (Q, KVH*D)
    sin_k = jnp.concatenate([sink_ref[...]] * KVH, axis=-1)

    q_rot = q_raw * cos_q + q_roth * sin_q                       # (Q, NH*D)
    k_rot = k_raw * cos_k + k_roth * sin_k                       # (Q, KVH*D)  -> also output

    # ---- batched attention over ALL heads (one scores dot, one softmax, one ctx dot)
    # query heads stacked along rows: rows [i*Q:(i+1)*Q] = query head i
    q_rows = jnp.concatenate([q_rot[:, i * D:(i + 1) * D] for i in range(NH)], axis=0)  # (NH*Q, D)

    # K / V stacked along rows per kv-head: rows [h*KV + kv] (past first, then new)
    k_pieces, v_pieces = [], []
    for h in range(KVH):
        k_pieces += [pk_ref[h], k_rot[:, h * D:(h + 1) * D]]
        v_pieces += [pv_ref[h], v_new[:, h * D:(h + 1) * D]]
    k_rows = jnp.concatenate(k_pieces, axis=0)                   # (KVH*KV, D)
    v_rows = jnp.concatenate(v_pieces, axis=0)                   # (KVH*KV, D)

    scores = jax.lax.dot_general(q_rows, k_rows, (((1,), (1,)), ((), ())),
                                 preferred_element_type=jnp.float32)       # (NH*Q, KVH*KV)
    scores = scores + mask_ref[...]                              # causal + cross-head block mask
    m = jnp.max(scores, axis=-1, keepdims=True)
    e = jnp.exp(scores - m)
    probs = e * pl.reciprocal(jnp.sum(e, axis=-1, keepdims=True), approx=True)
    ctx_rows = jnp.dot(probs, v_rows,
                       preferred_element_type=jnp.float32)       # (NH*Q, D)

    # reassemble heads along hidden and project out
    ctx = jnp.concatenate([ctx_rows[i * Q:(i + 1) * Q, :] for i in range(NH)], axis=-1)  # (Q, H)
    attn_out = jnp.dot(ctx.astype(jnp.bfloat16), wo_ref[...],
                       preferred_element_type=jnp.float32)
    h1 = attn_out + x

    # ---- ffn_norm
    rms2 = jnp.sqrt(jnp.mean(h1 * h1, axis=-1, keepdims=True))
    hn = fnw_ref[...] * (h1 * pl.reciprocal(rms2 + EPS, approx=True))

    # ---- fused text+vision SwiGLU (position select = precomputed 0/1 keep mask)
    gu = jnp.dot(hn.astype(jnp.bfloat16), w13_ref[...],
                 preferred_element_type=jnp.float32)             # (Q, 4*IM)
    gate = gu[:, :2 * IM]                                        # [text_gate | vis_gate]
    up   = gu[:, 2 * IM:]                                        # [text_up   | vis_up  ]
    inter = gate * pl.reciprocal(1.0 + jnp.exp(-gate), approx=True) * up * keep_ref[...]
    mlp = jnp.dot(inter.astype(jnp.bfloat16), w2c_ref[...],
                  preferred_element_type=jnp.float32)            # (Q, H)

    # ---- single lane-dense packed store: [hidden out | new K rows | new V rows]
    out_ref[...] = jnp.concatenate([h1 + mlp, k_rot, v_new], axis=-1)    # (Q, 128)


def prepare_params(params):
    """One-time weight preprocessing (permute / rotate-half / scale / stack / cast)."""
    wqkv = np.asarray(params['wqkv'], dtype=np.float32)          # ((G+2)*KVH*D, H)
    blocks = wqkv.T.reshape(H, KVH, G + 2, D)                    # column blocks of wqkv.T
    q_cols = blocks[:, :, :G, :].reshape(H, NH * D)              # query head order i = h*G + g
    k_cols = blocks[:, :, G, :].reshape(H, KVH * D)
    v_cols = blocks[:, :, G + 1, :].reshape(H, KVH * D)

    def rot_half_cols(w, nheads):
        w = w.reshape(H, nheads, D)
        return np.concatenate([-w[:, :, DH:], w[:, :, :DH]], axis=-1).reshape(H, nheads * D)

    scale = np.float32(1.0 / np.sqrt(D))                         # fold attention scale into Q
    wqkv_ext = np.concatenate(
        [q_cols * scale, rot_half_cols(q_cols, NH) * scale,
         k_cols, rot_half_cols(k_cols, KVH), v_cols], axis=1)    # (H, EXT_OUT)

    return {
        'wqkv_ext': jnp.asarray(wqkv_ext, dtype=jnp.bfloat16),
        'wo_t':     jnp.asarray(np.asarray(params['wo']).T, dtype=jnp.bfloat16),
        'anw':      jnp.asarray(params['attention_norm']).reshape(1, H).astype(jnp.float32),
        'fnw':      jnp.asarray(params['ffn_norm']).reshape(1, H).astype(jnp.float32),
        'w13':      jnp.asarray(np.concatenate(
                        [np.asarray(params['w1']).T, np.asarray(params['w1v']).T,
                         np.asarray(params['w3']).T, np.asarray(params['w3v']).T], axis=1),
                        dtype=jnp.bfloat16),                     # (H, 4*IM)
        'w2c':      jnp.asarray(np.concatenate(
                        [np.asarray(params['w2']).T, np.asarray(params['w2v']).T], axis=0),
                        dtype=jnp.bfloat16),                     # (2*IM, H)
    }


@functools.partial(jax.jit, static_argnums=(8,))
def internlm2_decoder_layer(hidden_states,        # (1, Q, H) f32
                            attention_mask,       # (1, Q, KV) f32
                            cos_k, sin_k,         # (1, D, Q) f32  (torch key layout)
                            cos_q, sin_q,         # (1, Q, D) f32
                            past_key_states,      # (KVH, D, P) f32 (torch layout)
                            past_value_states,    # (KVH, P, D) f32
                            split_factor,         # python int (static)
                            prepped):             # output of prepare_params
    # ---- tiny per-call glue (fused under jit)
    x2d = hidden_states[0]                                       # (Q, H)

    # block attention mask (NH*Q, KVH*KV): own kv-head block = causal mask, cross-head = -1e30
    am = attention_mask[0]                                       # (Q, KV)
    neg = jnp.full((Q, KV), -1e30, dtype=jnp.float32)
    mask_big = jnp.concatenate(
        [jnp.concatenate([am if h == (i // G) else neg for h in range(KVH)], axis=-1)
         for i in range(NH)], axis=0)                            # (NH*Q, KVH*KV)

    cos_q2 = cos_q[0]                                            # (Q, D)
    sin_q2 = sin_q[0]
    cos_k2 = jnp.swapaxes(cos_k[0], 0, 1)                        # (Q, D)
    sin_k2 = jnp.swapaxes(sin_k[0], 0, 1)

    pk_rows = jnp.swapaxes(past_key_states, 1, 2)                # (KVH, P, D) tiny fused transpose
    pv_rows = past_value_states                                  # (KVH, P, D)

    # static text/vision keep mask for the fused dual-MLP (split_factor is static)
    pos = np.arange(Q)
    is_vis = (pos >= PROMPT_HEAD_LENGTH) & (pos < split_factor)
    keep_np = np.zeros((Q, 2 * IM), np.float32)
    keep_np[~is_vis, :IM] = 1.0
    keep_np[is_vis, IM:] = 1.0
    keep = jnp.asarray(keep_np)

    packed = pl.pallas_call(
        decoder_layer_kernel,
        out_shape=jax.ShapeDtypeStruct((Q, PACK_OUT), jnp.float32),
        in_specs=[pl.BlockSpec(memory_space=pltpu.MemorySpace.VMEM)] * 15,
        out_specs=pl.BlockSpec(memory_space=pltpu.MemorySpace.VMEM),
    )(x2d, mask_big, cos_q2, sin_q2, cos_k2, sin_k2, pk_rows, pv_rows, keep,
      prepped['wqkv_ext'], prepped['wo_t'], prepped['anw'], prepped['fnw'],
      prepped['w13'], prepped['w2c'])

    # ---- epilogue: unpack lane-dense slab; cache concat / cast / layout restore in fused XLA
    out = packed[:, :H][None]                                    # (1, Q, H)
    k_new = packed[:, H:H + KW].reshape(Q, KVH, D)               # new K rows (rotated)
    v_new = packed[:, H + KW:].reshape(Q, KVH, D)                # new V rows
    save_k = jnp.concatenate([past_key_states,
                              jnp.transpose(k_new, (1, 2, 0))], axis=-1).astype(jnp.float16)
    save_v = jnp.concatenate([past_value_states,
                              jnp.transpose(v_new, (1, 0, 2))], axis=1).astype(jnp.float16)
    return out, save_k, save_v


# ---------------- pure-JAX reference (mirrors the torch code path) ----------------
def reference(hidden_states, attention_mask, cos_k, sin_k, cos_q, sin_q,
              past_k, past_v, split_factor, p):
    def rmsnorm(x, w):
        return w * (x / (jnp.sqrt(jnp.mean(x * x, -1, keepdims=True)) + EPS))

    def rot_half(x, axis):
        x1, x2 = jnp.split(x, 2, axis=axis)
        return jnp.concatenate([-x2, x1], axis=axis)

    x = hidden_states
    xn = rmsnorm(x, p['attention_norm'])
    qkv = (xn @ p['wqkv'].T).reshape(Q, KVH, 2 + G, D)
    q = qkv[:, :, :G, :].reshape(Q, NH, D).transpose(1, 0, 2)       # (NH, Q, D)
    k = qkv[:, :, G, :].transpose(1, 2, 0)                          # (KVH, D, Q)
    v = qkv[:, :, G + 1, :].transpose(1, 0, 2)                      # (KVH, Q, D)
    k = jnp.concatenate([past_k, k * cos_k + rot_half(k, 1) * sin_k], axis=-1)
    v = jnp.concatenate([past_v, v], axis=-2)
    save_k, save_v = k.astype(jnp.float16), v.astype(jnp.float16)
    k_rep = jnp.repeat(k, G, axis=0)                                # (NH, D, KV)
    v_rep = jnp.repeat(v, G, axis=0)                                # (NH, KV, D)
    q_rot = q * cos_q + rot_half(q, -1) * sin_q
    scores = jnp.einsum('hqd,hdk->hqk', q_rot, k_rep) * (1.0 / np.sqrt(D)) + attention_mask
    probs = jax.nn.softmax(scores, axis=-1)
    ctx = jnp.einsum('hqk,hkd->hqd', probs, v_rep).transpose(1, 0, 2).reshape(1, Q, H)
    h1 = ctx @ p['wo'].T + x
    hn = rmsnorm(h1, p['ffn_norm'])

    def mlp(z, w1, w3, w2):
        a = z @ w1.T
        return ((a * jax.nn.sigmoid(a)) * (z @ w3.T)) @ w2.T

    text = mlp(hn, p['w1'], p['w3'], p['w2'])
    vis = mlp(hn[:, PROMPT_HEAD_LENGTH:split_factor], p['w1v'], p['w3v'], p['w2v'])
    mid = jnp.concatenate([text[:, :PROMPT_HEAD_LENGTH], vis, text[:, split_factor:]], axis=1)
    return h1 + mid, save_k, save_v


if __name__ == "__main__":
    key = jax.random.PRNGKey(0)
    ks = jax.random.split(key, 16)

    def nrm(k, shape, scale=0.02):
        return (jax.random.normal(k, shape, dtype=jnp.float32) * scale)

    params = {
        'wqkv': nrm(ks[0], ((NH + 2 * KVH) * D, H)),
        'wo':   nrm(ks[1], (H, H)),
        'w1':   nrm(ks[2], (IM, H)),
        'w3':   nrm(ks[3], (IM, H)),
        'w2':   nrm(ks[4], (H, IM)),
        'w1v':  nrm(ks[5], (IM, H)),
        'w3v':  nrm(ks[6], (IM, H)),
        'w2v':  nrm(ks[7], (H, IM)),
        'attention_norm': jnp.ones((H,), jnp.float32),
        'ffn_norm':       jnp.ones((H,), jnp.float32),
    }
    prepped = prepare_params(params)          # one-time weight preprocessing

    hidden_states = jax.random.normal(ks[8], (1, Q, H), dtype=jnp.float32)
    past_k = jax.random.normal(ks[9], (KVH, D, P), dtype=jnp.float32) * 0.5
    past_v = jax.random.normal(ks[10], (KVH, P, D), dtype=jnp.float32) * 0.5

    # RoPE cos/sin tables (base=10000), positions P..P+Q-1 for the current tokens.
    inv_freq = 1.0 / (10000.0 ** (np.arange(0, D, 2, dtype=np.float32) / D))
    t = np.arange(P, P + Q, dtype=np.float32)
    freqs = np.einsum('i,j->ij', t, inv_freq)                      # (Q, D/2)
    emb = np.concatenate([freqs, freqs], axis=-1)                  # (Q, D)
    cos_q = jnp.asarray(np.cos(emb))[None]                         # (1, Q, D)
    sin_q = jnp.asarray(np.sin(emb))[None]
    cos_k = jnp.swapaxes(cos_q, 1, 2)                              # (1, D, Q)
    sin_k = jnp.swapaxes(sin_q, 1, 2)

    # causal mask for the current Q tokens over KV = past + current
    mask = np.zeros((1, Q, KV), dtype=np.float32)
    for i in range(Q):
        mask[0, i, P + i + 1:] = -1e9
    attention_mask = jnp.asarray(mask)

    out, new_k, new_v = internlm2_decoder_layer(
        hidden_states, attention_mask, cos_k, sin_k, cos_q, sin_q,
        past_k, past_v, SPLIT_FACTOR, prepped)
    jax.block_until_ready((out, new_k, new_v))

    ref_out, ref_k, ref_v = reference(
        hidden_states, attention_mask, cos_k, sin_k, cos_q, sin_q,
        past_k, past_v, SPLIT_FACTOR, params)

    np.testing.assert_allclose(np.asarray(out), np.asarray(ref_out), rtol=2e-2, atol=2e-2)
    np.testing.assert_allclose(np.asarray(new_k, dtype=np.float32),
                               np.asarray(ref_k, dtype=np.float32), rtol=2e-2, atol=2e-2)
    np.testing.assert_allclose(np.asarray(new_v, dtype=np.float32),
                               np.asarray(ref_v, dtype=np.float32), rtol=2e-2, atol=2e-2)

    print("KERNEL_OK")
</pallas_src>

<mosaic_0001>
module attributes {stable_mosaic.version = 11 : i64} {
  func.func @decoder_layer_kernel(%arg0: memref<8x64xf32, #tpu.memory_space<vmem>>, %arg1: memref<32x32xf32, #tpu.memory_space<vmem>>, %arg2: memref<8x16xf32, #tpu.memory_space<vmem>>, %arg3: memref<8x16xf32, #tpu.memory_space<vmem>>, %arg4: memref<8x16xf32, #tpu.memory_space<vmem>>, %arg5: memref<8x16xf32, #tpu.memory_space<vmem>>, %arg6: memref<2x8x16xf32, #tpu.memory_space<vmem>>, %arg7: memref<2x8x16xf32, #tpu.memory_space<vmem>>, %arg8: memref<8x256xf32, #tpu.memory_space<vmem>>, %arg9: memref<64x224xbf16, #tpu.memory_space<vmem>>, %arg10: memref<64x64xbf16, #tpu.memory_space<vmem>>, %arg11: memref<1x64xf32, #tpu.memory_space<vmem>>, %arg12: memref<1x64xf32, #tpu.memory_space<vmem>>, %arg13: memref<64x512xbf16, #tpu.memory_space<vmem>>, %arg14: memref<256x64xbf16, #tpu.memory_space<vmem>>, %arg15: memref<8x128xf32, #tpu.memory_space<vmem>>) attributes {dimension_semantics = [], scalar_prefetch = 0 : i64, scratch_operands = 0 : i64, tpu.core_type = #tpu.core_type<tc>} {
    %c0 = arith.constant 0 : index
    %c0_0 = arith.constant 0 : index
    %0 = vector.load %arg0[%c0, %c0_0] : memref<8x64xf32, #tpu.memory_space<vmem>>, vector<8x64xf32>
    %1 = arith.mulf %0, %0 : vector<8x64xf32>
    %cst = arith.constant dense<0.000000e+00> : vector<8xf32>
    %2 = vector.multi_reduction <add>, %1, %cst [1] : vector<8x64xf32> to vector<8xf32>
    %3 = vector.shape_cast %2 : vector<8xf32> to vector<8x1xf32>
    %cst_1 = arith.constant 6.400000e+01 : f32
    %4 = vector.broadcast %cst_1 : f32 to vector<8x1xf32>
    %5 = arith.divf %3, %4 : vector<8x1xf32>
    %6 = math.sqrt %5 : vector<8x1xf32>
    %c0_2 = arith.constant 0 : index
    %c0_3 = arith.constant 0 : index
    %7 = vector.load %arg11[%c0_2, %c0_3] : memref<1x64xf32, #tpu.memory_space<vmem>>, vector<1x64xf32>
    %cst_4 = arith.constant 9.99999997E-7 : f32
    %8 = vector.broadcast %cst_4 : f32 to vector<8x1xf32>
    %9 = arith.addf %6, %8 : vector<8x1xf32>
    %10 = tpu.reciprocal %9 {approx = true} : vector<8x1xf32> -> vector<8x1xf32>
    %11 = vector.broadcast %10 : vector<8x1xf32> to vector<8x64xf32>
    %12 = arith.mulf %0, %11 : vector<8x64xf32>
    %13 = vector.broadcast %7 : vector<1x64xf32> to vector<8x64xf32>
    %14 = arith.mulf %13, %12 : vector<8x64xf32>
    %15 = arith.truncf %14 : vector<8x64xf32> to vector<8x64xbf16>
    %c0_5 = arith.constant 0 : index
    %c0_6 = arith.constant 0 : index
    %16 = vector.load %arg9[%c0_5, %c0_6] : memref<64x224xbf16, #tpu.memory_space<vmem>>, vector<64x224xbf16>
    %cst_7 = arith.constant dense<0.000000e+00> : vector<8x224xf32>
    %17 = tpu.matmul %15, %16, %cst_7 {dimension_numbers = #tpu.dot_dimension_numbers<[1], [0], [0], [1], [0, 0, 1, 1], [], []>} : vector<8x64xbf16>, vector<64x224xbf16>, vector<8x224xf32> -> vector<8x224xf32>
    %18 = vector.extract_strided_slice %17 {offsets = [0, 0], sizes = [8, 64], strides = [1, 1]} : vector<8x224xf32> to vector<8x64xf32>
    %19 = vector.extract_strided_slice %17 {offsets = [0, 64], sizes = [8, 64], strides = [1, 1]} : vector<8x224xf32> to vector<8x64xf32>
    %20 = vector.extract_strided_slice %17 {offsets = [0, 128], sizes = [8, 32], strides = [1, 1]} : vector<8x224xf32> to vector<8x32xf32>
    %21 = vector.extract_strided_slice %17 {offsets = [0, 160], sizes = [8, 32], strides = [1, 1]} : vector<8x224xf32> to vector<8x32xf32>
    %22 = vector.extract_strided_slice %17 {offsets = [0, 192], sizes = [8, 32], strides = [1, 1]} : vector<8x224xf32> to vector<8x32xf32>
    %c0_8 = arith.constant 0 : index
    %c0_9 = arith.constant 0 : index
    %23 = vector.load %arg2[%c0_8, %c0_9] : memref<8x16xf32, #tpu.memory_space<vmem>>, vector<8x16xf32>
    %24 = tpu.concatenate %23, %23, %23, %23 in 1 : vector<8x16xf32>, vector<8x16xf32>, vector<8x16xf32>, vector<8x16xf32> -> vector<8x64xf32>
    %c0_10 = arith.constant 0 : index
    %c0_11 = arith.constant 0 : index
    %25 = vector.load %arg3[%c0_10, %c0_11] : memref<8x16xf32, #tpu.memory_space<vmem>>, vector<8x16xf32>
    %26 = tpu.concatenate %25, %25, %25, %25 in 1 : vector<8x16xf32>, vector<8x16xf32>, vector<8x16xf32>, vector<8x16xf32> -> vector<8x64xf32>
    %c0_12 = arith.constant 0 : index
    %c0_13 = arith.constant 0 : index
    %27 = vector.load %arg4[%c0_12, %c0_13] : memref<8x16xf32, #tpu.memory_space<vmem>>, vector<8x16xf32>
    %28 = tpu.concatenate %27, %27 in 1 : vector<8x16xf32>, vector<8x16xf32> -> vector<8x32xf32>
    %c0_14 = arith.constant 0 : index
    %c0_15 = arith.constant 0 : index
    %29 = vector.load %arg5[%c0_14, %c0_15] : memref<8x16xf32, #tpu.memory_space<vmem>>, vector<8x16xf32>
    %30 = tpu.concatenate %29, %29 in 1 : vector<8x16xf32>, vector<8x16xf32> -> vector<8x32xf32>
    %31 = arith.mulf %18, %24 : vector<8x64xf32>
    %32 = arith.mulf %19, %26 : vector<8x64xf32>
    %33 = arith.addf %31, %32 : vector<8x64xf32>
    %34 = arith.mulf %20, %28 : vector<8x32xf32>
    %35 = arith.mulf %21, %30 : vector<8x32xf32>
    %36 = arith.addf %34, %35 : vector<8x32xf32>
    %37 = vector.extract_strided_slice %33 {offsets = [0, 0], sizes = [8, 16], strides = [1, 1]} : vector<8x64xf32> to vector<8x16xf32>
    %38 = vector.extract_strided_slice %33 {offsets = [0, 16], sizes = [8, 16], strides = [1, 1]} : vector<8x64xf32> to vector<8x16xf32>
    %39 = vector.extract_strided_slice %33 {offsets = [0, 32], sizes = [8, 16], strides = [1, 1]} : vector<8x64xf32> to vector<8x16xf32>
    %40 = vector.extract_strided_slice %33 {offsets = [0, 48], sizes = [8, 16], strides = [1, 1]} : vector<8x64xf32> to vector<8x16xf32>
    %41 = tpu.concatenate %37, %38, %39, %40 in 0 : vector<8x16xf32>, vector<8x16xf32>, vector<8x16xf32>, vector<8x16xf32> -> vector<32x16xf32>
    %c0_16 = arith.constant 0 : index
    %c0_17 = arith.constant 0 : index
    %c0_18 = arith.constant 0 : index
    %42 = vector.load %arg6[%c0_16, %c0_17, %c0_18] : memref<2x8x16xf32, #tpu.memory_space<vmem>>, vector<1x8x16xf32>
    %43 = vector.shape_cast %42 : vector<1x8x16xf32> to vector<8x16xf32>
    %44 = vector.extract_strided_slice %36 {offsets = [0, 0], sizes = [8, 16], strides = [1, 1]} : vector<8x32xf32> to vector<8x16xf32>
    %c0_19 = arith.constant 0 : index
    %c0_20 = arith.constant 0 : index
    %c0_21 = arith.constant 0 : index
    %45 = vector.load %arg7[%c0_19, %c0_20, %c0_21] : memref<2x8x16xf32, #tpu.memory_space<vmem>>, vector<1x8x16xf32>
    %46 = vector.shape_cast %45 : vector<1x8x16xf32> to vector<8x16xf32>
    %47 = vector.extract_strided_slice %22 {offsets = [0, 0], sizes = [8, 16], strides = [1, 1]} : vector<8x32xf32> to vector<8x16xf32>
    %c1 = arith.constant 1 : index
    %c0_22 = arith.constant 0 : index
    %c0_23 = arith.constant 0 : index
    %48 = vector.load %arg6[%c1, %c0_22, %c0_23] : memref<2x8x16xf32, #tpu.memory_space<vmem>>, vector<1x8x16xf32>
    %49 = vector.shape_cast %48 : vector<1x8x16xf32> to vector<8x16xf32>
    %50 = vector.extract_strided_slice %36 {offsets = [0, 16], sizes = [8, 16], strides = [1, 1]} : vector<8x32xf32> to vector<8x16xf32>
    %c1_24 = arith.constant 1 : index
    %c0_25 = arith.constant 0 : index
    %c0_26 = arith.constant 0 : index
    %51 = vector.load %arg7[%c1_24, %c0_25, %c0_26] : memref<2x8x16xf32, #tpu.memory_space<vmem>>, vector<1x8x16xf32>
    %52 = vector.shape_cast %51 : vector<1x8x16xf32> to vector<8x16xf32>
    %53 = vector.extract_strided_slice %22 {offsets = [0, 16], sizes = [8, 16], strides = [1, 1]} : vector<8x32xf32> to vector<8x16xf32>
    %54 = tpu.concatenate %43, %44, %49, %50 in 0 : vector<8x16xf32>, vector<8x16xf32>, vector<8x16xf32>, vector<8x16xf32> -> vector<32x16xf32>
    %55 = tpu.concatenate %46, %47, %52, %53 in 0 : vector<8x16xf32>, vector<8x16xf32>, vector<8x16xf32>, vector<8x16xf32> -> vector<32x16xf32>
    %cst_27 = arith.constant dense<0.000000e+00> : vector<32x32xf32>
    %56 = tpu.matmul %41, %54, %cst_27 {dimension_numbers = #tpu.dot_dimension_numbers<[1], [1], [0], [0], [0, 0, 1, 0], [], []>} : vector<32x16xf32>, vector<32x16xf32>, vector<32x32xf32> -> vector<32x32xf32>
    %c0_28 = arith.constant 0 : index
    %c0_29 = arith.constant 0 : index
    %57 = vector.load %arg1[%c0_28, %c0_29] : memref<32x32xf32, #tpu.memory_space<vmem>>, vector<32x32xf32>
    %58 = arith.addf %56, %57 : vector<32x32xf32>
    %cst_30 = arith.constant dense<0xFF800000> : vector<32xf32>
    %59 = vector.multi_reduction <maximumf>, %58, %cst_30 [1] : vector<32x32xf32> to vector<32xf32>
    %60 = vector.shape_cast %59 : vector<32xf32> to vector<32x1xf32>
    %61 = vector.broadcast %60 : vector<32x1xf32> to vector<32x32xf32>
    %62 = arith.subf %58, %61 : vector<32x32xf32>
    %63 = math.exp %62 : vector<32x32xf32>
    %cst_31 = arith.constant dense<0.000000e+00> : vector<32xf32>
    %64 = vector.multi_reduction <add>, %63, %cst_31 [1] : vector<32x32xf32> to vector<32xf32>
    %65 = vector.shape_cast %64 : vector<32xf32> to vector<32x1xf32>
    %66 = tpu.reciprocal %65 {approx = true} : vector<32x1xf32> -> vector<32x1xf32>
    %67 = vector.broadcast %66 : vector<32x1xf32> to vector<32x32xf32>
    %68 = arith.mulf %63, %67 : vector<32x32xf32>
    %cst_32 = arith.constant dense<0.000000e+00> : vector<32x16xf32>
    %69 = tpu.matmul %68, %55, %cst_32 {dimension_numbers = #tpu.dot_dimension_numbers<[1], [0], [0], [1], [0, 0, 1, 1], [], []>} : vector<32x32xf32>, vector<32x16xf32>, vector<32x16xf32> -> vector<32x16xf32>
    %70 = vector.extract_strided_slice %69 {offsets = [0, 0], sizes = [8, 16], strides = [1, 1]} : vector<32x16xf32> to vector<8x16xf32>
    %71 = vector.extract_strided_slice %69 {offsets = [8, 0], sizes = [8, 16], strides = [1, 1]} : vector<32x16xf32> to vector<8x16xf32>
    %72 = vector.extract_strided_slice %69 {offsets = [16, 0], sizes = [8, 16], strides = [1, 1]} : vector<32x16xf32> to vector<8x16xf32>
    %73 = vector.extract_strided_slice %69 {offsets = [24, 0], sizes = [8, 16], strides = [1, 1]} : vector<32x16xf32> to vector<8x16xf32>
    %74 = tpu.concatenate %70, %71, %72, %73 in 1 : vector<8x16xf32>, vector<8x16xf32>, vector<8x16xf32>, vector<8x16xf32> -> vector<8x64xf32>
    %75 = arith.truncf %74 : vector<8x64xf32> to vector<8x64xbf16>
    %c0_33 = arith.constant 0 : index
    %c0_34 = arith.constant 0 : index
    %76 = vector.load %arg10[%c0_33, %c0_34] : memref<64x64xbf16, #tpu.memory_space<vmem>>, vector<64x64xbf16>
    %cst_35 = arith.constant dense<0.000000e+00> : vector<8x64xf32>
    %77 = tpu.matmul %75, %76, %cst_35 {dimension_numbers = #tpu.dot_dimension_numbers<[1], [0], [0], [1], [0, 0, 1, 1], [], []>} : vector<8x64xbf16>, vector<64x64xbf16>, vector<8x64xf32> -> vector<8x64xf32>
    %78 = arith.addf %77, %0 : vector<8x64xf32>
    %79 = arith.mulf %78, %78 : vector<8x64xf32>
    %cst_36 = arith.constant dense<0.000000e+00> : vector<8xf32>
    %80 = vector.multi_reduction <add>, %79, %cst_36 [1] : vector<8x64xf32> to vector<8xf32>
    %81 = vector.shape_cast %80 : vector<8xf32> to vector<8x1xf32>
    %cst_37 = arith.constant 6.400000e+01 : f32
    %82 = vector.broadcast %cst_37 : f32 to vector<8x1xf32>
    %83 = arith.divf %81, %82 : vector<8x1xf32>
    %84 = math.sqrt %83 : vector<8x1xf32>
    %c0_38 = arith.constant 0 : index
    %c0_39 = arith.constant 0 : index
    %85 = vector.load %arg12[%c0_38, %c0_39] : memref<1x64xf32, #tpu.memory_space<vmem>>, vector<1x64xf32>
    %cst_40 = arith.constant 9.99999997E-7 : f32
    %86 = vector.broadcast %cst_40 : f32 to vector<8x1xf32>
    %87 = arith.addf %84, %86 : vector<8x1xf32>
    %88 = tpu.reciprocal %87 {approx = true} : vector<8x1xf32> -> vector<8x1xf32>
    %89 = vector.broadcast %88 : vector<8x1xf32> to vector<8x64xf32>
    %90 = arith.mulf %78, %89 : vector<8x64xf32>
    %91 = vector.broadcast %85 : vector<1x64xf32> to vector<8x64xf32>
    %92 = arith.mulf %91, %90 : vector<8x64xf32>
    %93 = arith.truncf %92 : vector<8x64xf32> to vector<8x64xbf16>
    %c0_41 = arith.constant 0 : index
    %c0_42 = arith.constant 0 : index
    %94 = vector.load %arg13[%c0_41, %c0_42] : memref<64x512xbf16, #tpu.memory_space<vmem>>, vector<64x512xbf16>
    %cst_43 = arith.constant dense<0.000000e+00> : vector<8x512xf32>
    %95 = tpu.matmul %93, %94, %cst_43 {dimension_numbers = #tpu.dot_dimension_numbers<[1], [0], [0], [1], [0, 0, 1, 1], [], []>} : vector<8x64xbf16>, vector<64x512xbf16>, vector<8x512xf32> -> vector<8x512xf32>
    %96 = vector.extract_strided_slice %95 {offsets = [0, 0], sizes = [8, 256], strides = [1, 1]} : vector<8x512xf32> to vector<8x256xf32>
    %97 = vector.extract_strided_slice %95 {offsets = [0, 256], sizes = [8, 256], strides = [1, 1]} : vector<8x512xf32> to vector<8x256xf32>
    %cst_44 = arith.constant 0.000000e+00 : f32
    %98 = vector.broadcast %cst_44 : f32 to vector<8x256xf32>
    %99 = arith.subf %98, %96 : vector<8x256xf32>
    %100 = math.exp %99 : vector<8x256xf32>
    %cst_45 = arith.constant 1.000000e+00 : f32
    %101 = vector.broadcast %cst_45 : f32 to vector<8x256xf32>
    %102 = arith.addf %101, %100 : vector<8x256xf32>
    %103 = tpu.reciprocal %102 {approx = true} : vector<8x256xf32> -> vector<8x256xf32>
    %104 = arith.mulf %96, %103 : vector<8x256xf32>
    %105 = arith.mulf %104, %97 : vector<8x256xf32>
    %c0_46 = arith.constant 0 : index
    %c0_47 = arith.constant 0 : index
    %106 = vector.load %arg8[%c0_46, %c0_47] : memref<8x256xf32, #tpu.memory_space<vmem>>, vector<8x256xf32>
    %107 = arith.mulf %105, %106 : vector<8x256xf32>
    %108 = arith.truncf %107 : vector<8x256xf32> to vector<8x256xbf16>
    %c0_48 = arith.constant 0 : index
    %c0_49 = arith.constant 0 : index
    %109 = vector.load %arg14[%c0_48, %c0_49] : memref<256x64xbf16, #tpu.memory_space<vmem>>, vector<256x64xbf16>
    %cst_50 = arith.constant dense<0.000000e+00> : vector<8x64xf32>
    %110 = tpu.matmul %108, %109, %cst_50 {dimension_numbers = #tpu.dot_dimension_numbers<[1], [0], [0], [1], [0, 0, 1, 1], [], []>} : vector<8x256xbf16>, vector<256x64xbf16>, vector<8x64xf32> -> vector<8x64xf32>
    %111 = arith.addf %78, %110 : vector<8x64xf32>
    %112 = tpu.concatenate %111, %36, %22 in 1 : vector<8x64xf32>, vector<8x32xf32>, vector<8x32xf32> -> vector<8x128xf32>
    %c0_51 = arith.constant 0 : index
    %c0_52 = arith.constant 0 : index
    %113 = vector.load %arg15[%c0_51, %c0_52] : memref<8x128xf32, #tpu.memory_space<vmem>>, vector<8x128xf32>
    tpu.vector_store %arg15[%c0_51, %c0_52], %112 {strides = array<i32>} : memref<8x128xf32, #tpu.memory_space<vmem>>, vector<8x128xf32>,
    return
  }
}

</mosaic_0001>

<llo_original>
// kernel: internlm2_decoder_layer.1
$region0: #{internlm2_decoder_layer.1}
  #allocation0 [shape = 'u32[]', space=smem, size = 0x4, offset = 0x4, fixed_abs, tag = 'smem constant byte address 0x4 - core index']
  #allocation1 [shape = 'u32[144,128]{1,0:T(1,128)}', space=vmem, size = 0x12000, scoped, tag = 'internal scratch']
  %s0 = inlined_call_operand.hbm [shape: f32[8,64], index: 0, kind: input, shape index: {}]
  %s1 = inlined_call_operand.vmem [shape: f32[32,32], index: 1, kind: input, shape index: {}]
  %s2 = inlined_call_operand.hbm [shape: f32[8,16], index: 2, kind: input, shape index: {}]
  %s3 = inlined_call_operand.hbm [shape: f32[8,16], index: 3, kind: input, shape index: {}]
  %s4 = inlined_call_operand.hbm [shape: f32[8,16], index: 4, kind: input, shape index: {}]
  %s5 = inlined_call_operand.hbm [shape: f32[8,16], index: 5, kind: input, shape index: {}]
  %s6 = inlined_call_operand.vmem [shape: f32[2,8,16], index: 6, kind: input, shape index: {}]
  %s7 = inlined_call_operand.vmem [shape: f32[2,8,16], index: 7, kind: input, shape index: {}]
  %s8 = inlined_call_operand.vmem [shape: f32[8,256], index: 8, kind: input, shape index: {}]
  %s9 = inlined_call_operand.vmem [shape: bf16[64,224], index: 9, kind: input, shape index: {}]
  %s10 = inlined_call_operand.vmem [shape: bf16[64,64], index: 10, kind: input, shape index: {}]
  %s11 = inlined_call_operand.vmem [shape: f32[1,64], index: 11, kind: input, shape index: {}]
  %s12 = inlined_call_operand.vmem [shape: f32[1,64], index: 12, kind: input, shape index: {}]
  %s13 = inlined_call_operand.vmem [shape: bf16[64,512], index: 13, kind: input, shape index: {}]
  %s14 = inlined_call_operand.vmem [shape: bf16[256,64], index: 14, kind: input, shape index: {}]
  %s15 = inlined_call_operand.vmem [shape: f32[8,128], index: 15, kind: output, shape index: {}]
  %s16 = sld [smem:[#allocation0]]
  $region90: #{internlm2_decoder_layer.1} parent=0
    _
  %s18 = ssub.s32 1, %s16
  %s19 = scalar_select 0, %s18, %s16
  $region1: #{internlm2_decoder_layer.1} parent=0
    #allocation2 [shape = 'u8[4096]{0}', space=vmem, size = 0x1000, scoped, tag = 'input window, operand 0, single buffered']
    #allocation3 [shape = 's32[1]{0}', space=sflag, size = 0x4, scoped, tag = 'scoped memory for internlm2_decoder_layer.1']
    #allocation4 [shape = 'u8[4096]{0}', space=vmem, size = 0x1000, scoped, tag = 'input window, operand 2, single buffered']
    #allocation5 [shape = 's32[1]{0}', space=sflag, size = 0x4, scoped, tag = 'scoped memory for internlm2_decoder_layer.1']
    #allocation6 [shape = 'u8[4096]{0}', space=vmem, size = 0x1000, scoped, tag = 'input window, operand 3, single buffered']
    #allocation7 [shape = 'u8[4096]{0}', space=vmem, size = 0x1000, scoped, tag = 'input window, operand 4, single buffered']
    #allocation8 [shape = 's32[1]{0}', space=sflag, size = 0x4, scoped, tag = 'scoped memory for internlm2_decoder_layer.1']
    #allocation9 [shape = 'u8[4096]{0}', space=vmem, size = 0x1000, scoped, tag = 'input window, operand 5, single buffered']
    %20 = vsyncpa [#allocation3], 0
    %21 = vsyncpa [#allocation5], 0
    %22 = vsyncpa [#allocation8], 0
    // Predicated region
    $region2: #{internlm2_decoder_layer.1} parent=1 // pred_check
      _
    $region3: #{internlm2_decoder_layer.1} parent=1 // pred_check_branch
      %24 = sbr.rel (0) target = $region5
    $region4: #{internlm2_decoder_layer.1} parent=1 // pred_region
      %s26 = ssub.s32 128, 128
      %27 = vsyncadd [#allocation3], %s26
      %s29 = sshll.u32 [#allocation2], 4
      %s30 = int_to_ptr.vmem [resolvable:$true] %s29
      %32 = dma.hbm_to_vmem [thread:$0]  %s0, 128, %s30, [#allocation3]
    $region5: #{internlm2_decoder_layer.1} parent=1 // pred_fallthru
      _
    // Predicated region
    $region6: #{internlm2_decoder_layer.1} parent=1 // pred_check
      _
    $region7: #{internlm2_decoder_layer.1} parent=1 // pred_check_branch
      %34 = sbr.rel (0) target = $region9
    $region8: #{internlm2_decoder_layer.1} parent=1 // pred_region
      _
    $region9: #{internlm2_decoder_layer.1} parent=1 // pred_fallthru
      _
    // Predicated region
    $region10: #{internlm2_decoder_layer.1} parent=1 // pred_check
      _
    $region11: #{internlm2_decoder_layer.1} parent=1 // pred_check_branch
      %36 = sbr.rel (0) target = $region13
    $region12: #{internlm2_decoder_layer.1} parent=1 // pred_region
      %s38 = ssub.s32 128, 128
      %39 = vsyncadd [#allocation5], %s38
      %s41 = sshll.u32 [#allocation4], 4
      %s42 = int_to_ptr.vmem [resolvable:$true] %s41
      %44 = dma.hbm_to_vmem [thread:$0]  %s2, 128, %s42, [#allocation5]
    $region13: #{internlm2_decoder_layer.1} parent=1 // pred_fallthru
      _
    // Predicated region
    $region14: #{internlm2_decoder_layer.1} parent=1 // pred_check
      _
    $region15: #{internlm2_decoder_layer.1} parent=1 // pred_check_branch
      %46 = sbr.rel (0) target = $region17
    $region16: #{internlm2_decoder_layer.1} parent=1 // pred_region
      %s48 = ssub.s32 128, 128
      %49 = vsyncadd [#allocation5], %s48
      %s51 = sshll.u32 [#allocation6], 4
      %s52 = int_to_ptr.vmem [resolvable:$true] %s51
      %54 = dma.hbm_to_vmem [thread:$0]  %s3, 128, %s52, [#allocation5]
    $region17: #{internlm2_decoder_layer.1} parent=1 // pred_fallthru
      _
    // Predicated region
    $region18: #{internlm2_decoder_layer.1} parent=1 // pred_check
      _
    $region19: #{internlm2_decoder_layer.1} parent=1 // pred_check_branch
      %56 = sbr.rel (0) target = $region21
    $region20: #{internlm2_decoder_layer.1} parent=1 // pred_region
      %s58 = ssub.s32 128, 128
      %59 = vsyncadd [#allocation8], %s58
      %s61 = sshll.u32 [#allocation7], 4
      %s62 = int_to_ptr.vmem [resolvable:$true] %s61
      %64 = dma.hbm_to_vmem [thread:$0]  %s4, 128, %s62, [#allocation8]
    $region21: #{internlm2_decoder_layer.1} parent=1 // pred_fallthru
      _
    // Predicated region
    $region22: #{internlm2_decoder_layer.1} parent=1 // pred_check
      _
    $region23: #{internlm2_decoder_layer.1} parent=1 // pred_check_branch
      %66 = sbr.rel (0) target = $region25
    $region24: #{internlm2_decoder_layer.1} parent=1 // pred_region
      %s68 = ssub.s32 128, 128
      %69 = vsyncadd [#allocation8], %s68
      %s71 = sshll.u32 [#allocation9], 4
      %s72 = int_to_ptr.vmem [resolvable:$true] %s71
      %74 = dma.hbm_to_vmem [thread:$0]  %s5, 128, %s72, [#allocation8]
    $region25: #{internlm2_decoder_layer.1} parent=1 // pred_fallthru
      _
    // Predicated region
    $region26: #{internlm2_decoder_layer.1} parent=1 // pred_check
      _
    $region27: #{internlm2_decoder_layer.1} parent=1 // pred_check_branch
      %76 = sbr.rel (0) target = $region29
    $region28: #{internlm2_decoder_layer.1} parent=1 // pred_region
      _
    $region29: #{internlm2_decoder_layer.1} parent=1 // pred_fallthru
      _
    // Predicated region
    $region30: #{internlm2_decoder_layer.1} parent=1 // pred_check
      _
    $region31: #{internlm2_decoder_layer.1} parent=1 // pred_check_branch
      %78 = sbr.rel (0) target = $region33
    $region32: #{internlm2_decoder_layer.1} parent=1 // pred_region
      _
    $region33: #{internlm2_decoder_layer.1} parent=1 // pred_fallthru
      _
    // Predicated region
    $region34: #{internlm2_decoder_layer.1} parent=1 // pred_check
      _
    $region35: #{internlm2_decoder_layer.1} parent=1 // pred_check_branch
      %80 = sbr.rel (0) target = $region37
    $region36: #{internlm2_decoder_layer.1} parent=1 // pred_region
      _
    $region37: #{internlm2_decoder_layer.1} parent=1 // pred_fallthru
      _
    // Predicated region
    $region38: #{internlm2_decoder_layer.1} parent=1 // pred_check
      _
    $region39: #{internlm2_decoder_layer.1} parent=1 // pred_check_branch
      %82 = sbr.rel (0) target = $region41
    $region40: #{internlm2_decoder_layer.1} parent=1 // pred_region
      _
    $region41: #{internlm2_decoder_layer.1} parent=1 // pred_fallthru
      _
    // Predicated region
    $region42: #{internlm2_decoder_layer.1} parent=1 // pred_check
      _
    $region43: #{internlm2_decoder_layer.1} parent=1 // pred_check_branch
      %84 = sbr.rel (0) target = $region45
    $region44: #{internlm2_decoder_layer.1} parent=1 // pred_region
      _
    $region45: #{internlm2_decoder_layer.1} parent=1 // pred_fallthru
      _
    // Predicated region
    $region46: #{internlm2_decoder_layer.1} parent=1 // pred_check
      _
    $region47: #{internlm2_decoder_layer.1} parent=1 // pred_check_branch
      %86 = sbr.rel (0) target = $region49
    $region48: #{internlm2_decoder_layer.1} parent=1 // pred_region
      _
    $region49: #{internlm2_decoder_layer.1} parent=1 // pred_fallthru
      _
    // Predicated region
    $region50: #{internlm2_decoder_layer.1} parent=1 // pred_check
      _
    $region51: #{internlm2_decoder_layer.1} parent=1 // pred_check_branch
      %88 = sbr.rel (0) target = $region53
    $region52: #{internlm2_decoder_layer.1} parent=1 // pred_region
      _
    $region53: #{internlm2_decoder_layer.1} parent=1 // pred_fallthru
      _
    // Predicated region
    $region54: #{internlm2_decoder_layer.1} parent=1 // pred_check
      _
    $region55: #{internlm2_decoder_layer.1} parent=1 // pred_check_branch
      %90 = sbr.rel (0) target = $region57
    $region56: #{internlm2_decoder_layer.1} parent=1 // pred_region
      _
    $region57: #{internlm2_decoder_layer.1} parent=1 // pred_fallthru
      _
    // Predicated region
    $region58: #{internlm2_decoder_layer.1} parent=1 // pred_check
      _
    $region59: #{internlm2_decoder_layer.1} parent=1 // pred_check_branch
      %92 = sbr.rel (0) target = $region61
    $region60: #{internlm2_decoder_layer.1} parent=1 // pred_region
      _
    $region61: #{internlm2_decoder_layer.1} parent=1 // pred_fallthru
      _
    // Predicated region
    $region62: #{internlm2_decoder_layer.1} parent=1 // pred_check
      _
    $region63: #{internlm2_decoder_layer.1} parent=1 // pred_check_branch
      %94 = sbr.rel (0) target = $region65
    $region64: #{internlm2_decoder_layer.1} parent=1 // pred_region
      %95 = dma.done [#allocation3], 128
    $region65: #{internlm2_decoder_layer.1} parent=1 // pred_fallthru
      _
    // Predicated region
    $region66: #{internlm2_decoder_layer.1} parent=1 // pred_check
      _
    $region67: #{internlm2_decoder_layer.1} parent=1 // pred_check_branch
      %97 = sbr.rel (0) target = $region69
    $region68: #{internlm2_decoder_layer.1} parent=1 // pred_region
      %98 = dma.done [#allocation5], 128
    $region69: #{internlm2_decoder_layer.1} parent=1 // pred_fallthru
      _
    // Predicated region
    $region70: #{internlm2_decoder_layer.1} parent=1 // pred_check
      _
    $region71: #{internlm2_decoder_layer.1} parent=1 // pred_check_branch
      %100 = sbr.rel (0) target = $region73
    $region72: #{internlm2_decoder_layer.1} parent=1 // pred_region
      %101 = dma.done [#allocation5], 128
    $region73: #{internlm2_decoder_layer.1} parent=1 // pred_fallthru
      _
    // Predicated region
    $region74: #{internlm2_decoder_layer.1} parent=1 // pred_check
      _
    $region75: #{internlm2_decoder_layer.1} parent=1 // pred_check_branch
      %103 = sbr.rel (0) target = $region77
    $region76: #{internlm2_decoder_layer.1} parent=1 // pred_region
      %104 = dma.done [#allocation8], 128
    $region77: #{internlm2_decoder_layer.1} parent=1 // pred_fallthru
      _
    // Predicated region
    $region78: #{internlm2_decoder_layer.1} parent=1 // pred_check
      _
    $region79: #{internlm2_decoder_layer.1} parent=1 // pred_check_branch
      %106 = sbr.rel (0) target = $region81
    $region80: #{internlm2_decoder_layer.1} parent=1 // pred_region
      %107 = dma.done [#allocation8], 128
    $region81: #{internlm2_decoder_layer.1} parent=1 // pred_fallthru
      _
    %v109 = vld [vmem:[#allocation2] sm:$0xff]
    %v110 = vmul.f32 %v109, %v109
    %vm111 = vcmask 523264
    %v112 = vsel %vm111, %v110, 0.0
    %113 = vadd.xlane.f32.xlu0 %v112
    %v114 = vpop.xlane.xlu0 %113
    %v115 = vrcp.pop 64.0
    %v116 = vmul.f32 %v114, %v115
    %v117 = vrsqrt.pop %v116
    %v118 = vmul.f32 %v116, %v117
    %vm119 = vcmp.eq.f32.partialorder %v116, inf
    %v120 = vsel %vm119, %v116, %v118
    %vm121 = vcmp.eq.f32.partialorder %v116, 0.0
    %v122 = vand.u32 %v116, 2147483648
    %v123 = vsel %vm121, %v122, %v120
    %v124 = vld [vmem:[%s11] sm:$0x1]
    %v125 = vadd.f32 %v123, 1e-06
    %v126 = vrcp.pop %v125
    %v127 = vmul.f32 %v109, %v126
    %v129 = vlaneseq
    %v130 = vshrl.u32 %v129, 7
    %v131 = vsub.s32 0, %v130
    %v132 = vrot.slane %v124, %v131
    %v134 = vmul.f32 %v132, %v127
    %v135 = vpack.c.bf16 %v134, %v134
    %v136 = vld [vmem:[%s9] sm:$0xff]
    %v137 = vld [vmem:[%s9 + $0x8] sm:$0xff]
    %v138 = vld [vmem:[%s9 + $0x10] sm:$0xff]
    %v139 = vld [vmem:[%s9 + $0x18] sm:$0xff]
    %v140 = vld [vmem:[%s9 + $0x20] sm:$0xff]
    %v141 = vld [vmem:[%s9 + $0x28] sm:$0xff]
    %v142 = vld [vmem:[%s9 + $0x30] sm:$0xff]
    %v143 = vld [vmem:[%s9 + $0x38] sm:$0xff]
    %v152 = vunpack.c.l.b16 %v136
    %v153 = vunpack.c.h.b16 %v136
    %v154 = vunpack.c.l.b16 %v137
    %v155 = vunpack.c.h.b16 %v137
    %v156 = vunpack.c.l.b16 %v138
    %v157 = vunpack.c.h.b16 %v138
    %v158 = vunpack.c.l.b16 %v139
    %v159 = vunpack.c.h.b16 %v139
    %v160 = vunpack.c.l.b16 %v140
    %v161 = vunpack.c.h.b16 %v140
    %v162 = vunpack.c.l.b16 %v141
    %v163 = vunpack.c.h.b16 %v141
    %v164 = vunpack.c.l.b16 %v142
    %v165 = vunpack.c.h.b16 %v142
    %v166 = vunpack.c.l.b16 %v143
    %v167 = vunpack.c.h.b16 %v143
    %v168 = vpack.c.b16 %v154, %v152
    %v169 = vpack.c.b16 %v155, %v153
    %v170 = vpack.c.b16 %v158, %v156
    %v171 = vpack.c.b16 %v159, %v157
    %v172 = vpack.c.b16 %v162, %v160
    %v173 = vpack.c.b16 %v163, %v161
    %v174 = vpack.c.b16 %v166, %v164
    %v175 = vpack.c.b16 %v167, %v165
    %v185 = vsel %vm111, %v135, 0
    %187 = vmatprep.subr.bf16.mxu0 %v169
    %188 = vmatpush1.bf16.msra.mxu0 %v168
    %189 = vmatprep.subr.bf16.mxu0 %v171
    %190 = vmatpush1.bf16.msra.mxu0 %v170
    %191 = vmatprep.subr.bf16.mxu0 %v173
    %192 = vmatpush1.bf16.msra.mxu0 %v172
    %193 = vmatprep.subr.bf16.mxu0 %v175
    %194 = vmatpush1.bf16.msra.mxu0 %v174
    %195 = vmatprep.subr.bf16.mxu0 0
    %196 = vmatpush1.bf16.msra.mxu0 0
    %197 = vmatprep.subr.bf16.mxu0 0
    %198 = vmatpush1.bf16.msra.mxu0 0
    %199 = vmatprep.subr.bf16.mxu0 0
    %200 = vmatpush1.bf16.msra.mxu0 0
    %201 = vmatprep.subr.bf16.mxu0 0
    %202 = vmatpush1.bf16.msra.mxu0 0
    %203 = vmatprep.subr.bf16.mxu0 0
    %204 = vmatpush1.bf16.msra.mxu0 0
    %205 = vmatprep.subr.bf16.mxu0 0
    %206 = vmatpush1.bf16.msra.mxu0 0
    %207 = vmatprep.subr.bf16.mxu0 0
    %208 = vmatpush1.bf16.msra.mxu0 0
    %209 = vmatprep.subr.bf16.mxu0 0
    %210 = vmatpush1.bf16.msra.mxu0 0
    %211 = vmatprep.subr.bf16.mxu0 0
    %212 = vmatpush1.bf16.msra.mxu0 0
    %213 = vmatprep.subr.bf16.mxu0 0
    %214 = vmatpush1.bf16.msra.mxu0 0
    %215 = vmatprep.subr.bf16.mxu0 0
    %216 = vmatpush1.bf16.msra.mxu0 0
    %217 = vmatprep.subr.bf16.mxu0 0
    %218 = vmatpush1.bf16.msra.mxu0 0
    %219 = vmatprep.mubr.bf16.mxu0 0
    %220 = vmatmul.mubr.bf16.gmra.mrb[0].mxu0 %v185
    %v221 = vpop.f32.mrb[0].mxu0
    %v222 = vadd.f32 0.0, %v221
    %v223 = vpop.f32.mrb[0].mxu0
    %v224 = vadd.f32 0.0, %v223
    %v225 = vpop.f32.mrb[0].mxu0
    %v226 = vpop.f32.mrb[0].mxu0
    %227 = vdwg.mxu0
    %v228 = vld [vmem:[#allocation4] sm:$0xff]
    %230 = vrot.lane.b32.xlu0 %v228, 16
    %v231 = vpop.permute.xlu0 %230
    %233 = vrot.lane.b32.xlu0 %v228, 32
    %v234 = vpop.permute.xlu0 %233
    %236 = vrot.lane.b32.xlu0 %v228, 48
    %v237 = vpop.permute.xlu0 %236
    %vm239 = vcmask 130048
    %v240 = vsel %vm239, %v228, %v231
    %vm241 = vcmask 261120
    %v242 = vsel %vm241, %v240, %v234
    %vm243 = vcmask 392192
    %v244 = vsel %vm243, %v242, %v237
    %v245 = vld [vmem:[#allocation6] sm:$0xff]
    %247 = vrot.lane.b32.xlu0 %v245, 16
    %v248 = vpop.permute.xlu0 %247
    %250 = vrot.lane.b32.xlu0 %v245, 32
    %v251 = vpop.permute.xlu0 %250
    %253 = vrot.lane.b32.xlu0 %v245, 48
    %v254 = vpop.permute.xlu0 %253
    %v256 = vsel %vm239, %v245, %v248
    %v257 = vsel %vm241, %v256, %v251
    %v258 = vsel %vm243, %v257, %v254
    %v259 = vld [vmem:[#allocation7] sm:$0xff]
    %261 = vrot.lane.b32.xlu0 %v259, 16
    %v262 = vpop.permute.xlu0 %261
    %v264 = vsel %vm239, %v259, %v262
    %v265 = vld [vmem:[#allocation9] sm:$0xff]
    %267 = vrot.lane.b32.xlu0 %v265, 16
    %v268 = vpop.permute.xlu0 %267
    %v270 = vsel %vm239, %v265, %v268
    %v271 = vmul.f32 %v222, %v244
    %273 = vrot.lane.b32.xlu0 %v258, 64
    %v274 = vpop.permute.xlu0 %273
    %v276 = vmul.f32 %v222, %v274
    %278 = vrot.lane.b32.xlu0 %v276, 64
    %v279 = vpop.permute.xlu0 %278
    %v281 = vadd.f32 %v271, %v279
    %v282 = vmul.f32 %v224, %v264
    %284 = vrot.lane.b32.xlu0 %v270, 32
    %v285 = vpop.permute.xlu0 %284
    %v287 = vmul.f32 %v224, %v285
    %289 = vrot.lane.b32.xlu0 %v287, 96
    %v290 = vpop.permute.xlu0 %289
    %v292 = vadd.f32 %v282, %v290
    %294 = vrot.lane.b32.xlu0 %v281, 112
    %v295 = vpop.permute.xlu0 %294
    %296 = vrot.lane.b32.xlu0 %v281, 96
    %v297 = vpop.permute.xlu0 %296
    %298 = vrot.lane.b32.xlu0 %v281, 80
    %v299 = vpop.permute.xlu0 %298
    %v300 = vld [vmem:[%s6] sm:$0xff]
    %v301 = vld [vmem:[%s7] sm:$0xff]
    %s302 = scalar_lea.vmem %s6, 8
    %v303 = vld [vmem:[%s302] sm:$0xff]
    %s304 = scalar_lea.vmem %s7, 8
    %v305 = vld [vmem:[%s304] sm:$0xff]
    %307 = vrot.lane.b32.xlu0 %v292, 112
    %v308 = vpop.permute.xlu0 %307
    %310 = vrot.lane.b32.xlu0 %v224, 64
    %v311 = vpop.permute.xlu0 %310
    %313 = vrot.lane.b32.xlu0 %v224, 48
    %v314 = vpop.permute.xlu0 %313
    %v316 = vld [vmem:[%s1] sm:$0xff]
    %v317 = vld [vmem:[%s1 + $0x8] sm:$0xff]
    %v318 = vld [vmem:[%s1 + $0x10] sm:$0xff]
    %v319 = vld [vmem:[%s1 + $0x18] sm:$0xff]
    %v320 = vsel %vm239, %v281, 0
    %v322 = vsel %vm239, %v295, 0
    %v324 = vsel %vm239, %v297, 0
    %v326 = vsel %vm239, %v299, 0
    %v329 = vsel %vm239, %v300, 0
    %v331 = vsel %vm239, %v292, 0
    %v334 = vsel %vm239, %v303, 0
    %v336 = vsel %vm239, %v308, 0
    %338 = vmatprep.subr.mxu0 0.0
    %339 = vmatpush1.xpose.msra.mxu0 %v329
    %340 = vmatprep.subr.mxu0 0.0
    %341 = vmatpush1.xpose.msra.mxu0 %v331
    %342 = vmatprep.subr.mxu0 0.0
    %343 = vmatpush1.xpose.msra.mxu0 %v334
    %344 = vmatprep.subr.mxu0 0.0
    %345 = vmatpush1.xpose.msra.mxu0 %v336
    %346 = vmatprep.subr.mxu0 0.0
    %347 = vmatpush1.xpose.msra.mxu0 0.0
    %348 = vmatprep.subr.mxu0 0.0
    %349 = vmatpush1.xpose.msra.mxu0 0.0
    %350 = vmatprep.subr.mxu0 0.0
    %351 = vmatpush1.xpose.msra.mxu0 0.0
    %352 = vmatprep.subr.mxu0 0.0
    %353 = vmatpush1.xpose.msra.mxu0 0.0
    %354 = vmatprep.subr.mxu0 0.0
    %355 = vmatpush1.xpose.msra.mxu0 0.0
    %356 = vmatprep.subr.mxu0 0.0
    %357 = vmatpush1.xpose.msra.mxu0 0.0
    %358 = vmatprep.subr.mxu0 0.0
    %359 = vmatpush1.xpose.msra.mxu0 0.0
    %360 = vmatprep.subr.mxu0 0.0
    %361 = vmatpush1.xpose.msra.mxu0 0.0
    %362 = vmatprep.subr.mxu0 0.0
    %363 = vmatpush1.xpose.msra.mxu0 0.0
    %364 = vmatprep.subr.mxu0 0.0
    %365 = vmatpush1.xpose.msra.mxu0 0.0
    %366 = vmatprep.subr.mxu0 0.0
    %367 = vmatpush1.xpose.msra.mxu0 0.0
    %368 = vmatprep.subr.mxu0 0.0
    %369 = vmatpush1.xpose.msra.mxu0 0.0
    %370 = vmatprep.subr.mxu0 0.0
    %371 = vmatpush1.xpose.msra.mxu0 0.0
    %372 = vmatprep.subr.mxu0 0.0
    %373 = vmatpush1.xpose.msra.mxu0 0.0
    %374 = vmatprep.subr.mxu0 0.0
    %375 = vmatpush1.xpose.msra.mxu0 0.0
    %376 = vmatprep.subr.mxu0 0.0
    %377 = vmatpush1.xpose.msra.mxu0 0.0
    %378 = vmatprep.subr.mxu0 0.0
    %379 = vmatpush1.xpose.msra.mxu0 0.0
    %380 = vmatprep.subr.mxu0 0.0
    %381 = vmatpush1.xpose.msra.mxu0 0.0
    %382 = vmatprep.subr.mxu0 0.0
    %383 = vmatpush1.xpose.msra.mxu0 0.0
    %384 = vmatprep.subr.mxu0 0.0
    %385 = vmatpush1.xpose.msra.mxu0 0.0
    %386 = vmatprep.subr.mxu0 0.0
    %387 = vmatpush1.xpose.msra.mxu0 0.0
    %388 = vmatprep.subr.mxu0 0.0
    %389 = vmatpush1.xpose.msra.mxu0 0.0
    %390 = vmatprep.subr.mxu0 0.0
    %391 = vmatpush1.xpose.msra.mxu0 0.0
    %392 = vmatprep.subr.mxu0 0.0
    %393 = vmatpush1.xpose.msra.mxu0 0.0
    %394 = vmatprep.subr.mxu0 0.0
    %395 = vmatpush1.xpose.msra.mxu0 0.0
    %396 = vmatprep.subr.mxu0 0.0
    %397 = vmatpush1.xpose.msra.mxu0 0.0
    %398 = vmatprep.subr.mxu0 0.0
    %399 = vmatpush1.xpose.msra.mxu0 0.0
    %400 = vmatprep.subr.mxu0 0.0
    %401 = vmatpush1.xpose.msra.mxu0 0.0
    %402 = vmatprep.mubr.f32.mxu0 0.0
    %403 = vmatmul.mubr.f32.gmra.mrb[0].mxu0 %v320
    %v404 = vpop.f32.mrb[0].mxu0
    %v405 = vadd.f32 %v316, %v404
    %v406 = vpop.f32.mrb[0].mxu0
    %407 = vmatprep.mubr.f32.mxu0 0.0
    %408 = vmatmul.mubr.f32.gmra.mrb[0].mxu0 %v322
    %v409 = vpop.f32.mrb[0].mxu0
    %v410 = vadd.f32 %v317, %v409
    %v411 = vpop.f32.mrb[0].mxu0
    %412 = vmatprep.mubr.f32.mxu0 0.0
    %413 = vmatmul.mubr.f32.gmra.mrb[0].mxu0 %v324
    %v414 = vpop.f32.mrb[0].mxu0
    %v415 = vadd.f32 %v318, %v414
    %v416 = vpop.f32.mrb[0].mxu0
    %417 = vmatprep.mubr.f32.mxu0 0.0
    %418 = vmatmul.mubr.f32.gmra.mrb[0].mxu0 %v326
    %v419 = vpop.f32.mrb[0].mxu0
    %v420 = vadd.f32 %v319, %v419
    %v421 = vpop.f32.mrb[0].mxu0
    %422 = vdwg.mxu0
    %v423 = vsel %vm241, %v405, -inf
    %424 = vmax.xlane.f32.xlu0 %v423
    %v425 = vpop.xlane.xlu0 %424
    %v426 = vsel %vm241, %v410, -inf
    %427 = vmax.xlane.f32.xlu0 %v426
    %v428 = vpop.xlane.xlu0 %427
    %v429 = vsel %vm241, %v415, -inf
    %430 = vmax.xlane.f32.xlu0 %v429
    %v431 = vpop.xlane.xlu0 %430
    %v432 = vsel %vm241, %v420, -inf
    %433 = vmax.xlane.f32.xlu0 %v432
    %v434 = vpop.xlane.xlu0 %433
    %v435 = vsub.f32 %v405, %v425
    %v436 = vsub.f32 %v410, %v428
    %v437 = vsub.f32 %v415, %v431
    %v438 = vsub.f32 %v420, %v434
    %v439 = vmul.f32 %v435, 1.442695
    %v440 = vpow.pop %v439
    %v441 = vmul.f32 %v436, 1.442695
    %v442 = vpow.pop %v441
    %v443 = vmul.f32 %v437, 1.442695
    %v444 = vpow.pop %v443
    %v445 = vmul.f32 %v438, 1.442695
    %v446 = vpow.pop %v445
    %v447 = vsel %vm241, %v440, 0.0
    %448 = vadd.xlane.f32.xlu0 %v447
    %v449 = vpop.xlane.xlu0 %448
    %v450 = vsel %vm241, %v442, 0.0
    %451 = vadd.xlane.f32.xlu0 %v450
    %v452 = vpop.xlane.xlu0 %451
    %v453 = vsel %vm241, %v444, 0.0
    %454 = vadd.xlane.f32.xlu0 %v453
    %v455 = vpop.xlane.xlu0 %454
    %v456 = vsel %vm241, %v446, 0.0
    %457 = vadd.xlane.f32.xlu0 %v456
    %v458 = vpop.xlane.xlu0 %457
    %v459 = vrcp.pop %v449
    %v460 = vrcp.pop %v452
    %v461 = vrcp.pop %v455
    %v462 = vrcp.pop %v458
    %v463 = vmul.f32 %v440, %v459
    %v464 = vmul.f32 %v442, %v460
    %v465 = vmul.f32 %v444, %v461
    %v466 = vmul.f32 %v446, %v462
    %v468 = vsel %vm241, %v463, 0
    %v471 = vsel %vm241, %v464, 0
    %v474 = vsel %vm241, %v465, 0
    %v477 = vsel %vm241, %v466, 0
    %479 = vmatprep.subr.mxu0 0.0
    %480 = vmatpush1.msra.mxu0 %v301
    %481 = vmatprep.subr.mxu0 0.0
    %482 = vmatpush1.msra.mxu0 %v311
    %483 = vmatprep.subr.mxu0 0.0
    %484 = vmatpush1.msra.mxu0 %v305
    %485 = vmatprep.subr.mxu0 0.0
    %486 = vmatpush1.msra.mxu0 %v314
    %487 = vmatprep.subr.mxu0 0.0
    %488 = vmatpush1.msra.mxu0 0.0
    %489 = vmatprep.subr.mxu0 0.0
    %490 = vmatpush1.msra.mxu0 0.0
    %491 = vmatprep.subr.mxu0 0.0
    %492 = vmatpush1.msra.mxu0 0.0
    %493 = vmatprep.subr.mxu0 0.0
    %494 = vmatpush1.msra.mxu0 0.0
    %495 = vmatprep.subr.mxu0 0.0
    %496 = vmatpush1.msra.mxu0 0.0
    %497 = vmatprep.subr.mxu0 0.0
    %498 = vmatpush1.msra.mxu0 0.0
    %499 = vmatprep.subr.mxu0 0.0
    %500 = vmatpush1.msra.mxu0 0.0
    %501 = vmatprep.subr.mxu0 0.0
    %502 = vmatpush1.msra.mxu0 0.0
    %503 = vmatprep.subr.mxu0 0.0
    %504 = vmatpush1.msra.mxu0 0.0
    %505 = vmatprep.subr.mxu0 0.0
    %506 = vmatpush1.msra.mxu0 0.0
    %507 = vmatprep.subr.mxu0 0.0
    %508 = vmatpush1.msra.mxu0 0.0
    %509 = vmatprep.subr.mxu0 0.0
    %510 = vmatpush1.msra.mxu0 0.0
    %511 = vmatprep.subr.mxu0 0.0
    %512 = vmatpush1.msra.mxu0 0.0
    %513 = vmatprep.subr.mxu0 0.0
    %514 = vmatpush1.msra.mxu0 0.0
    %515 = vmatprep.subr.mxu0 0.0
    %516 = vmatpush1.msra.mxu0 0.0
    %517 = vmatprep.subr.mxu0 0.0
    %518 = vmatpush1.msra.mxu0 0.0
    %519 = vmatprep.subr.mxu0 0.0
    %520 = vmatpush1.msra.mxu0 0.0
    %521 = vmatprep.subr.mxu0 0.0
    %522 = vmatpush1.msra.mxu0 0.0
    %523 = vmatprep.subr.mxu0 0.0
    %524 = vmatpush1.msra.mxu0 0.0
    %525 = vmatprep.subr.mxu0 0.0
    %526 = vmatpush1.msra.mxu0 0.0
    %527 = vmatprep.subr.mxu0 0.0
    %528 = vmatpush1.msra.mxu0 0.0
    %529 = vmatprep.subr.mxu0 0.0
    %530 = vmatpush1.msra.mxu0 0.0
    %531 = vmatprep.subr.mxu0 0.0
    %532 = vmatpush1.msra.mxu0 0.0
    %533 = vmatprep.subr.mxu0 0.0
    %534 = vmatpush1.msra.mxu0 0.0
    %535 = vmatprep.subr.mxu0 0.0
    %536 = vmatpush1.msra.mxu0 0.0
    %537 = vmatprep.subr.mxu0 0.0
    %538 = vmatpush1.msra.mxu0 0.0
    %539 = vmatprep.subr.mxu0 0.0
    %540 = vmatpush1.msra.mxu0 0.0
    %541 = vmatprep.subr.mxu0 0.0
    %542 = vmatpush1.msra.mxu0 0.0
    %543 = vmatprep.mubr.f32.mxu0 0.0
    %544 = vmatmul.mubr.f32.gmra.mrb[0].mxu0 %v468
    %v545 = vpop.f32.mrb[0].mxu0
    %v546 = vadd.f32 0.0, %v545
    %v547 = vpop.f32.mrb[0].mxu0
    %548 = vmatprep.mubr.f32.mxu0 0.0
    %549 = vmatmul.mubr.f32.gmra.mrb[0].mxu0 %v471
    %v550 = vpop.f32.mrb[0].mxu0
    %v551 = vadd.f32 0.0, %v550
    %v552 = vpop.f32.mrb[0].mxu0
    %553 = vmatprep.mubr.f32.mxu0 0.0
    %554 = vmatmul.mubr.f32.gmra.mrb[0].mxu0 %v474
    %v555 = vpop.f32.mrb[0].mxu0
    %v556 = vadd.f32 0.0, %v555
    %v557 = vpop.f32.mrb[0].mxu0
    %558 = vmatprep.mubr.f32.mxu0 0.0
    %559 = vmatmul.mubr.f32.gmra.mrb[0].mxu0 %v477
    %v560 = vpop.f32.mrb[0].mxu0
    %v561 = vadd.f32 0.0, %v560
    %v562 = vpop.f32.mrb[0].mxu0
    %563 = vdwg.mxu0
    %565 = vrot.lane.b32.xlu0 %v551, 16
    %v566 = vpop.permute.xlu0 %565
    %569 = vrot.lane.b32.xlu0 %v556, 32
    %v570 = vpop.permute.xlu0 %569
    %573 = vrot.lane.b32.xlu0 %v561, 48
    %v574 = vpop.permute.xlu0 %573
    %v576 = vsel %vm239, %v546, %v566
    %v577 = vsel %vm241, %v576, %v570
    %v578 = vsel %vm243, %v577, %v574
    %v579 = vpack.c.bf16 %v578, %v578
    %v580 = vld [vmem:[%s10] sm:$0xf]
    %v581 = vld [vmem:[%s10 + $0x4] sm:$0xf]
    %v582 = vld [vmem:[%s10 + $0x8] sm:$0xf]
    %v583 = vld [vmem:[%s10 + $0xc] sm:$0xf]
    %v584 = vld [vmem:[%s10 + $0x10] sm:$0xf]
    %v585 = vld [vmem:[%s10 + $0x14] sm:$0xf]
    %v586 = vld [vmem:[%s10 + $0x18] sm:$0xf]
    %v587 = vld [vmem:[%s10 + $0x1c] sm:$0xf]
    %v596 = vunpack.c.l.b16 %v580
    %v597 = vunpack.c.l.b16 %v581
    %v598 = vunpack.c.l.b16 %v582
    %v599 = vunpack.c.l.b16 %v583
    %v600 = vunpack.c.l.b16 %v584
    %v601 = vunpack.c.l.b16 %v585
    %v602 = vunpack.c.l.b16 %v586
    %v603 = vunpack.c.l.b16 %v587
    %v604 = vpack.c.b16 %v597, %v596
    %v605 = vpack.c.b16 %v599, %v598
    %v606 = vpack.c.b16 %v601, %v600
    %v607 = vpack.c.b16 %v603, %v602
    %v613 = vsel %vm111, %v579, 0
    %615 = vmatprep.subr.bf16.mxu0 0
    %616 = vmatpush1.bf16.msra.mxu0 %v604
    %617 = vmatprep.subr.bf16.mxu0 0
    %618 = vmatpush1.bf16.msra.mxu0 %v605
    %619 = vmatprep.subr.bf16.mxu0 0
    %620 = vmatpush1.bf16.msra.mxu0 %v606
    %621 = vmatprep.subr.bf16.mxu0 0
    %622 = vmatpush1.bf16.msra.mxu0 %v607
    %623 = vmatprep.subr.bf16.mxu0 0
    %624 = vmatpush1.bf16.msra.mxu0 0
    %625 = vmatprep.subr.bf16.mxu0 0
    %626 = vmatpush1.bf16.msra.mxu0 0
    %627 = vmatprep.subr.bf16.mxu0 0
    %628 = vmatpush1.bf16.msra.mxu0 0
    %629 = vmatprep.subr.bf16.mxu0 0
    %630 = vmatpush1.bf16.msra.mxu0 0
    %631 = vmatprep.subr.bf16.mxu0 0
    %632 = vmatpush1.bf16.msra.mxu0 0
    %633 = vmatprep.subr.bf16.mxu0 0
    %634 = vmatpush1.bf16.msra.mxu0 0
    %635 = vmatprep.subr.bf16.mxu0 0
    %636 = vmatpush1.bf16.msra.mxu0 0
    %637 = vmatprep.subr.bf16.mxu0 0
    %638 = vmatpush1.bf16.msra.mxu0 0
    %639 = vmatprep.subr.bf16.mxu0 0
    %640 = vmatpush1.bf16.msra.mxu0 0
    %641 = vmatprep.subr.bf16.mxu0 0
    %642 = vmatpush1.bf16.msra.mxu0 0
    %643 = vmatprep.subr.bf16.mxu0 0
    %644 = vmatpush1.bf16.msra.mxu0 0
    %645 = vmatprep.subr.bf16.mxu0 0
    %646 = vmatpush1.bf16.msra.mxu0 0
    %647 = vmatprep.mubr.bf16.mxu0 0
    %648 = vmatmul.mubr.bf16.gmra.mrb[0].mxu0 %v613
    %v649 = vpop.f32.mrb[0].mxu0
    %v650 = vadd.f32 %v109, %v649
    %v651 = vpop.f32.mrb[0].mxu0
    %v652 = vpop.f32.mrb[0].mxu0
    %v653 = vpop.f32.mrb[0].mxu0
    %654 = vdwg.mxu0
    %v655 = vmul.f32 %v650, %v650
    %v656 = vsel %vm111, %v655, 0.0
    %657 = vadd.xlane.f32.xlu0 %v656
    %v658 = vpop.xlane.xlu0 %657
    %v659 = vmul.f32 %v658, %v115
    %v660 = vrsqrt.pop %v659
    %v661 = vmul.f32 %v659, %v660
    %vm662 = vcmp.eq.f32.partialorder %v659, inf
    %v663 = vsel %vm662, %v659, %v661
    %vm664 = vcmp.eq.f32.partialorder %v659, 0.0
    %v665 = vand.u32 %v659, 2147483648
    %v666 = vsel %vm664, %v665, %v663
    %v667 = vld [vmem:[%s12] sm:$0x1]
    %v668 = vadd.f32 %v666, 1e-06
    %v669 = vrcp.pop %v668
    %v670 = vmul.f32 %v650, %v669
    %v672 = vlaneseq
    %v673 = vshrl.u32 %v672, 7
    %v674 = vsub.s32 0, %v673
    %v675 = vrot.slane %v667, %v674
    %v677 = vmul.f32 %v675, %v670
    %v678 = vpack.c.bf16 %v677, %v677
    %v679 = vld [vmem:[%s13] sm:$0xff]
    %v680 = vld [vmem:[%s13 + $0x8] sm:$0xff]
    %v681 = vld [vmem:[%s13 + $0x10] sm:$0xff]
    %v682 = vld [vmem:[%s13 + $0x18] sm:$0xff]
    %v683 = vld [vmem:[%s13 + $0x20] sm:$0xff]
    %v684 = vld [vmem:[%s13 + $0x28] sm:$0xff]
    %v685 = vld [vmem:[%s13 + $0x30] sm:$0xff]
    %v686 = vld [vmem:[%s13 + $0x38] sm:$0xff]
    %v687 = vld [vmem:[%s13 + $0x40] sm:$0xff]
    %v688 = vld [vmem:[%s13 + $0x48] sm:$0xff]
    %v689 = vld [vmem:[%s13 + $0x50] sm:$0xff]
    %v690 = vld [vmem:[%s13 + $0x58] sm:$0xff]
    %v691 = vld [vmem:[%s13 + $0x60] sm:$0xff]
    %v692 = vld [vmem:[%s13 + $0x68] sm:$0xff]
    %v693 = vld [vmem:[%s13 + $0x70] sm:$0xff]
    %v694 = vld [vmem:[%s13 + $0x78] sm:$0xff]
    %v711 = vunpack.c.l.b16 %v679
    %v712 = vunpack.c.h.b16 %v679
    %v713 = vunpack.c.l.b16 %v680
    %v714 = vunpack.c.h.b16 %v680
    %v715 = vunpack.c.l.b16 %v681
    %v716 = vunpack.c.h.b16 %v681
    %v717 = vunpack.c.l.b16 %v682
    %v718 = vunpack.c.h.b16 %v682
    %v719 = vunpack.c.l.b16 %v683
    %v720 = vunpack.c.h.b16 %v683
    %v721 = vunpack.c.l.b16 %v684
    %v722 = vunpack.c.h.b16 %v684
    %v723 = vunpack.c.l.b16 %v685
    %v724 = vunpack.c.h.b16 %v685
    %v725 = vunpack.c.l.b16 %v686
    %v726 = vunpack.c.h.b16 %v686
    %v727 = vunpack.c.l.b16 %v687
    %v728 = vunpack.c.h.b16 %v687
    %v729 = vunpack.c.l.b16 %v688
    %v730 = vunpack.c.h.b16 %v688
    %v731 = vunpack.c.l.b16 %v689
    %v732 = vunpack.c.h.b16 %v689
    %v733 = vunpack.c.l.b16 %v690
    %v734 = vunpack.c.h.b16 %v690
    %v735 = vunpack.c.l.b16 %v691
    %v736 = vunpack.c.h.b16 %v691
    %v737 = vunpack.c.l.b16 %v692
    %v738 = vunpack.c.h.b16 %v692
    %v739 = vunpack.c.l.b16 %v693
    %v740 = vunpack.c.h.b16 %v693
    %v741 = vunpack.c.l.b16 %v694
    %v742 = vunpack.c.h.b16 %v694
    %v743 = vpack.c.b16 %v715, %v711
    %v744 = vpack.c.b16 %v716, %v712
    %v745 = vpack.c.b16 %v717, %v713
    %v746 = vpack.c.b16 %v718, %v714
    %v747 = vpack.c.b16 %v723, %v719
    %v748 = vpack.c.b16 %v724, %v720
    %v749 = vpack.c.b16 %v725, %v721
    %v750 = vpack.c.b16 %v726, %v722
    %v751 = vpack.c.b16 %v731, %v727
    %v752 = vpack.c.b16 %v732, %v728
    %v753 = vpack.c.b16 %v733, %v729
    %v754 = vpack.c.b16 %v734, %v730
    %v755 = vpack.c.b16 %v739, %v735
    %v756 = vpack.c.b16 %v740, %v736
    %v757 = vpack.c.b16 %v741, %v737
    %v758 = vpack.c.b16 %v742, %v738
    %v776 = vsel %vm111, %v678, 0
    %778 = vmatprep.subr.bf16.mxu0 %v744
    %779 = vmatpush1.bf16.msra.mxu0 %v743
    %780 = vmatprep.subr.bf16.mxu0 %v748
    %781 = vmatpush1.bf16.msra.mxu0 %v747
    %782 = vmatprep.subr.bf16.mxu0 %v752
    %783 = vmatpush1.bf16.msra.mxu0 %v751
    %784 = vmatprep.subr.bf16.mxu0 %v756
    %785 = vmatpush1.bf16.msra.mxu0 %v755
    %786 = vmatprep.subr.bf16.mxu0 0
    %787 = vmatpush1.bf16.msra.mxu0 0
    %788 = vmatprep.subr.bf16.mxu0 0
    %789 = vmatpush1.bf16.msra.mxu0 0
    %790 = vmatprep.subr.bf16.mxu0 0
    %791 = vmatpush1.bf16.msra.mxu0 0
    %792 = vmatprep.subr.bf16.mxu0 0
    %793 = vmatpush1.bf16.msra.mxu0 0
    %794 = vmatprep.subr.bf16.mxu0 0
    %795 = vmatpush1.bf16.msra.mxu0 0
    %796 = vmatprep.subr.bf16.mxu0 0
    %797 = vmatpush1.bf16.msra.mxu0 0
    %798 = vmatprep.subr.bf16.mxu0 0
    %799 = vmatpush1.bf16.msra.mxu0 0
    %800 = vmatprep.subr.bf16.mxu0 0
    %801 = vmatpush1.bf16.msra.mxu0 0
    %802 = vmatprep.subr.bf16.mxu0 0
    %803 = vmatpush1.bf16.msra.mxu0 0
    %804 = vmatprep.subr.bf16.mxu0 0
    %805 = vmatpush1.bf16.msra.mxu0 0
    %806 = vmatprep.subr.bf16.mxu0 0
    %807 = vmatpush1.bf16.msra.mxu0 0
    %808 = vmatprep.subr.bf16.mxu0 0
    %809 = vmatpush1.bf16.msra.mxu0 0
    %810 = vmatprep.mubr.bf16.mxu0 0
    %811 = vmatmul.mubr.bf16.gmra.mrb[0].mxu0 %v776
    %v812 = vpop.f32.mrb[0].mxu0
    %v813 = vadd.f32 0.0, %v812
    %v814 = vpop.f32.mrb[0].mxu0
    %v815 = vadd.f32 0.0, %v814
    %v816 = vpop.f32.mrb[0].mxu0
    %v817 = vpop.f32.mrb[0].mxu0
    %818 = vdwg.mxu0
    %819 = vmatprep.subr.bf16.mxu0 %v746
    %820 = vmatpush1.bf16.msra.mxu0 %v745
    %821 = vmatprep.subr.bf16.mxu0 %v750
    %822 = vmatpush1.bf16.msra.mxu0 %v749
    %823 = vmatprep.subr.bf16.mxu0 %v754
    %824 = vmatpush1.bf16.msra.mxu0 %v753
    %825 = vmatprep.subr.bf16.mxu0 %v758
    %826 = vmatpush1.bf16.msra.mxu0 %v757
    %827 = vmatprep.subr.bf16.mxu0 0
    %828 = vmatpush1.bf16.msra.mxu0 0
    %829 = vmatprep.subr.bf16.mxu0 0
    %830 = vmatpush1.bf16.msra.mxu0 0
    %831 = vmatprep.subr.bf16.mxu0 0
    %832 = vmatpush1.bf16.msra.mxu0 0
    %833 = vmatprep.subr.bf16.mxu0 0
    %834 = vmatpush1.bf16.msra.mxu0 0
    %835 = vmatprep.subr.bf16.mxu0 0
    %836 = vmatpush1.bf16.msra.mxu0 0
    %837 = vmatprep.subr.bf16.mxu0 0
    %838 = vmatpush1.bf16.msra.mxu0 0
    %839 = vmatprep.subr.bf16.mxu0 0
    %840 = vmatpush1.bf16.msra.mxu0 0
    %841 = vmatprep.subr.bf16.mxu0 0
    %842 = vmatpush1.bf16.msra.mxu0 0
    %843 = vmatprep.subr.bf16.mxu0 0
    %844 = vmatpush1.bf16.msra.mxu0 0
    %845 = vmatprep.subr.bf16.mxu0 0
    %846 = vmatpush1.bf16.msra.mxu0 0
    %847 = vmatprep.subr.bf16.mxu0 0
    %848 = vmatpush1.bf16.msra.mxu0 0
    %849 = vmatprep.subr.bf16.mxu0 0
    %850 = vmatpush1.bf16.msra.mxu0 0
    %851 = vmatprep.mubr.bf16.mxu0 0
    %852 = vmatmul.mubr.bf16.gmra.mrb[0].mxu0 %v776
    %v853 = vpop.f32.mrb[0].mxu0
    %v854 = vadd.f32 0.0, %v853
    %v855 = vpop.f32.mrb[0].mxu0
    %v856 = vadd.f32 0.0, %v855
    %v857 = vpop.f32.mrb[0].mxu0
    %v858 = vpop.f32.mrb[0].mxu0
    %859 = vdwg.mxu0
    %v860 = vsub.f32 0.0, %v813
    %v861 = vsub.f32 0.0, %v815
    %v862 = vmul.f32 %v860, 1.442695
    %v863 = vpow.pop %v862
    %v864 = vmul.f32 %v861, 1.442695
    %v865 = vpow.pop %v864
    %v866 = vadd.f32 %v863, 1.0
    %v867 = vadd.f32 %v865, 1.0
    %v868 = vrcp.pop %v866
    %v869 = vrcp.pop %v867
    %v870 = vmul.f32 %v813, %v868
    %v871 = vmul.f32 %v815, %v869
    %v872 = vmul.f32 %v870, %v854
    %v873 = vmul.f32 %v871, %v856
    %v874 = vld [vmem:[%s8] sm:$0xff]
    %v875 = vld [vmem:[%s8 + $0x8] sm:$0xff]
    %v876 = vmul.f32 %v872, %v874
    %v877 = vmul.f32 %v873, %v875
    %v878 = vpack.c.bf16 %v876, %v876
    %v879 = vpack.c.bf16 %v877, %v877
    %v880 = vld [vmem:[%s14] sm:$0xf]
    %v881 = vld [vmem:[%s14 + $0x4] sm:$0xf]
    %v882 = vld [vmem:[%s14 + $0x8] sm:$0xf]
    %v883 = vld [vmem:[%s14 + $0xc] sm:$0xf]
    %v884 = vld [vmem:[%s14 + $0x10] sm:$0xf]
    %v885 = vld [vmem:[%s14 + $0x14] sm:$0xf]
    %v886 = vld [vmem:[%s14 + $0x18] sm:$0xf]
    %v887 = vld [vmem:[%s14 + $0x1c] sm:$0xf]
    %v888 = vld [vmem:[%s14 + $0x20] sm:$0xf]
    %v889 = vld [vmem:[%s14 + $0x24] sm:$0xf]
    %v890 = vld [vmem:[%s14 + $0x28] sm:$0xf]
    %v891 = vld [vmem:[%s14 + $0x2c] sm:$0xf]
    %v892 = vld [vmem:[%s14 + $0x30] sm:$0xf]
    %v893 = vld [vmem:[%s14 + $0x34] sm:$0xf]
    %v894 = vld [vmem:[%s14 + $0x38] sm:$0xf]
    %v895 = vld [vmem:[%s14 + $0x3c] sm:$0xf]
    %v896 = vld [vmem:[%s14 + $0x40] sm:$0xf]
    %v897 = vld [vmem:[%s14 + $0x44] sm:$0xf]
    %v898 = vld [vmem:[%s14 + $0x48] sm:$0xf]
    %v899 = vld [vmem:[%s14 + $0x4c] sm:$0xf]
    %v900 = vld [vmem:[%s14 + $0x50] sm:$0xf]
    %v901 = vld [vmem:[%s14 + $0x54] sm:$0xf]
    %v902 = vld [vmem:[%s14 + $0x58] sm:$0xf]
    %v903 = vld [vmem:[%s14 + $0x5c] sm:$0xf]
    %v904 = vld [vmem:[%s14 + $0x60] sm:$0xf]
    %v905 = vld [vmem:[%s14 + $0x64] sm:$0xf]
    %v906 = vld [vmem:[%s14 + $0x68] sm:$0xf]
    %v907 = vld [vmem:[%s14 + $0x6c] sm:$0xf]
    %v908 = vld [vmem:[%s14 + $0x70] sm:$0xf]
    %v909 = vld [vmem:[%s14 + $0x74] sm:$0xf]
    %v910 = vld [vmem:[%s14 + $0x78] sm:$0xf]
    %v911 = vld [vmem:[%s14 + $0x7c] sm:$0xf]
    %v944 = vunpack.c.l.b16 %v880
    %v945 = vunpack.c.l.b16 %v881
    %v946 = vunpack.c.l.b16 %v882
    %v947 = vunpack.c.l.b16 %v883
    %v948 = vunpack.c.l.b16 %v884
    %v949 = vunpack.c.l.b16 %v885
    %v950 = vunpack.c.l.b16 %v886
    %v951 = vunpack.c.l.b16 %v887
    %v952 = vunpack.c.l.b16 %v888
    %v953 = vunpack.c.l.b16 %v889
    %v954 = vunpack.c.l.b16 %v890
    %v955 = vunpack.c.l.b16 %v891
    %v956 = vunpack.c.l.b16 %v892
    %v957 = vunpack.c.l.b16 %v893
    %v958 = vunpack.c.l.b16 %v894
    %v959 = vunpack.c.l.b16 %v895
    %v960 = vunpack.c.l.b16 %v896
    %v961 = vunpack.c.l.b16 %v897
    %v962 = vunpack.c.l.b16 %v898
    %v963 = vunpack.c.l.b16 %v899
    %v964 = vunpack.c.l.b16 %v900
    %v965 = vunpack.c.l.b16 %v901
    %v966 = vunpack.c.l.b16 %v902
    %v967 = vunpack.c.l.b16 %v903
    %v968 = vunpack.c.l.b16 %v904
    %v969 = vunpack.c.l.b16 %v905
    %v970 = vunpack.c.l.b16 %v906
    %v971 = vunpack.c.l.b16 %v907
    %v972 = vunpack.c.l.b16 %v908
    %v973 = vunpack.c.l.b16 %v909
    %v974 = vunpack.c.l.b16 %v910
    %v975 = vunpack.c.l.b16 %v911
    %v976 = vpack.c.b16 %v945, %v944
    %v977 = vpack.c.b16 %v947, %v946
    %v978 = vpack.c.b16 %v949, %v948
    %v979 = vpack.c.b16 %v951, %v950
    %v980 = vpack.c.b16 %v953, %v952
    %v981 = vpack.c.b16 %v955, %v954
    %v982 = vpack.c.b16 %v957, %v956
    %v983 = vpack.c.b16 %v959, %v958
    %v984 = vpack.c.b16 %v961, %v960
    %v985 = vpack.c.b16 %v963, %v962
    %v986 = vpack.c.b16 %v965, %v964
    %v987 = vpack.c.b16 %v967, %v966
    %v988 = vpack.c.b16 %v969, %v968
    %v989 = vpack.c.b16 %v971, %v970
    %v990 = vpack.c.b16 %v973, %v972
    %v991 = vpack.c.b16 %v975, %v974
    %1008 = vmatprep.subr.bf16.mxu0 0
    %1009 = vmatpush1.bf16.msra.mxu0 %v976
    %1010 = vmatprep.subr.bf16.mxu0 0
    %1011 = vmatpush1.bf16.msra.mxu0 %v977
    %1012 = vmatprep.subr.bf16.mxu0 0
    %1013 = vmatpush1.bf16.msra.mxu0 %v978
    %1014 = vmatprep.subr.bf16.mxu0 0
    %1015 = vmatpush1.bf16.msra.mxu0 %v979
    %1016 = vmatprep.subr.bf16.mxu0 0
    %1017 = vmatpush1.bf16.msra.mxu0 %v980
    %1018 = vmatprep.subr.bf16.mxu0 0
    %1019 = vmatpush1.bf16.msra.mxu0 %v981
    %1020 = vmatprep.subr.bf16.mxu0 0
    %1021 = vmatpush1.bf16.msra.mxu0 %v982
    %1022 = vmatprep.subr.bf16.mxu0 0
    %1023 = vmatpush1.bf16.msra.mxu0 %v983
    %1024 = vmatprep.subr.bf16.mxu0 0
    %1025 = vmatpush1.bf16.msra.mxu0 %v984
    %1026 = vmatprep.subr.bf16.mxu0 0
    %1027 = vmatpush1.bf16.msra.mxu0 %v985
    %1028 = vmatprep.subr.bf16.mxu0 0
    %1029 = vmatpush1.bf16.msra.mxu0 %v986
    %1030 = vmatprep.subr.bf16.mxu0 0
    %1031 = vmatpush1.bf16.msra.mxu0 %v987
    %1032 = vmatprep.subr.bf16.mxu0 0
    %1033 = vmatpush1.bf16.msra.mxu0 %v988
    %1034 = vmatprep.subr.bf16.mxu0 0
    %1035 = vmatpush1.bf16.msra.mxu0 %v989
    %1036 = vmatprep.subr.bf16.mxu0 0
    %1037 = vmatpush1.bf16.msra.mxu0 %v990
    %1038 = vmatprep.subr.bf16.mxu0 0
    %1039 = vmatpush1.bf16.msra.mxu0 %v991
    %1040 = vmatprep.mubr.bf16.mxu0 %v879
    %1041 = vmatmul.mubr.bf16.gmra.mrb[0].mxu0 %v878
    %v1042 = vpop.f32.mrb[0].mxu0
    %v1043 = vadd.f32 0.0, %v1042
    %v1044 = vpop.f32.mrb[0].mxu0
    %v1045 = vpop.f32.mrb[0].mxu0
    %v1046 = vpop.f32.mrb[0].mxu0
    %1047 = vdwg.mxu0
    %v1048 = vadd.f32 %v650, %v1043
    %1049 = vrot.lane.b32.xlu0 %v292, 64
    %v1050 = vpop.permute.xlu0 %1049
    %1052 = vrot.lane.b32.xlu0 %v224, 32
    %v1053 = vpop.permute.xlu0 %1052
    %v1055 = vsel %vm111, %v1048, %v1050
    %vm1056 = vcmask 785408
    %v1057 = vsel %vm1056, %v1055, %v1053
    %1058 = vst [vmem:[%s15] sm:$0xff] %v1057
    // Predicated region
    $region82: #{internlm2_decoder_layer.1} parent=1 // pred_check
      _
    $region83: #{internlm2_decoder_layer.1} parent=1 // pred_check_branch
      %1060 = sbr.rel (0) target = $region85
    $region84: #{internlm2_decoder_layer.1} parent=1 // pred_region
      _
    $region85: #{internlm2_decoder_layer.1} parent=1 // pred_fallthru
      _
    // Predicated region
    $region86: #{internlm2_decoder_layer.1} parent=1 // pred_check
      _
    $region87: #{internlm2_decoder_layer.1} parent=1 // pred_check_branch
      %1062 = sbr.rel (0) target = $region89
    $region88: #{internlm2_decoder_layer.1} parent=1 // pred_region
      _
    $region89: #{internlm2_decoder_layer.1} parent=1 // pred_fallthru
      _
    %1063 = vsyncpa [#allocation3], 1
    %1064 = vsyncpa [#allocation5], 1
    %1065 = vsyncpa [#allocation8], 1

</llo_original>
